<compile_context>
chip_gen: v6e
topology: v6e:2x2x1
jax: 0.10.0
libtpu: 0.0.40
codegen_flags: <defaults>
</compile_context>

<pallas_src>
import jax
import jax.numpy as jnp
import numpy as np
from jax import lax
from jax.experimental import pallas as pl
from jax.experimental.pallas import tpu as pltpu


# ----------------------------------------------------------------------------
# Pallas kernel: the whole forward pass (matmuls, batch-norm reductions,
# relu, sigmoid, sqrt) happens here.  Inputs: x_flat (B, 12) and one param slab.
#
# Param slab layout (88, 64) f32:
#   rows  0:12  W1'  folded im2col conv1 weight   [c*3+tau, t*32+f]
#   rows 12:16  zero padding (keeps w2 tile-aligned at row 16)
#   rows 16:80  W2   stacked conv2 weight         [s*32+c_in, g_out]
#   row  80     conv1 bias, duplicated over the 2 taps (lane t*32+f)
#   row  81     bn1 gamma (lanes 0:32)      row 82  bn1 beta (lanes 0:32)
#   row  83     conv2 bias                  row 84  bn2 gamma      row 85  bn2 beta
#   row  86     fc weight (64,)             row 87  fc bias at lane 0
# ----------------------------------------------------------------------------
def sdm_kernel(x_ref, prm_ref, out_ref):
    B = x_ref.shape[0]

    x = x_ref[...]                       # (B, 12)
    w1 = prm_ref[0:12, :]                # (12, 64)
    w2 = prm_ref[16:80, :]               # (64, 64)  (tile-aligned slice)
    b1 = prm_ref[80:81, :]               # (1, 64)  conv1 bias, tap-duplicated
    g1 = prm_ref[81:82, 0:32]            # (1, 32)
    be1 = prm_ref[82:83, 0:32]           # (1, 32)
    b2 = prm_ref[83:84, :]               # (1, 64)
    g2 = prm_ref[84:85, :]               # (1, 64)
    be2 = prm_ref[85:86, :]              # (1, 64)
    fcw = prm_ref[86:87, :]              # (1, 64)
    fcb = prm_ref[87:88, 0:1]            # (1, 1)

    # ---- conv1 via folded-im2col weight: one (B,12)@(12,64) matmul ----
    # output lane t*32 + f  <=>  conv1 output channel f at time step t
    y = jnp.dot(x, w1, preferred_element_type=jnp.float32) + b1        # (B, 64)

    # ---- bn1 (training-mode batch stats over batch and the 2 time taps) ----
    # single-pass fused stats: var = E[x^2] - mean^2 ; then fold to scale/shift.
    ns = jnp.sum(y, axis=0, keepdims=True)                             # (1, 64)
    qs = jnp.sum(y * y, axis=0, keepdims=True)                         # (1, 64)
    inv_n1 = 1.0 / (2.0 * B)                                           # trace-time constant
    m32 = (ns[:, 0:32] + ns[:, 32:64]) * inv_n1                        # per-channel mean
    q32 = (qs[:, 0:32] + qs[:, 32:64]) * inv_n1
    v32 = q32 - m32 * m32                                              # biased variance
    sc32 = lax.rsqrt(v32 + 1e-5) * g1
    sh32 = be1 - m32 * sc32
    scale1 = jnp.concatenate([sc32, sc32], axis=-1)                    # (1, 64)
    shift1 = jnp.concatenate([sh32, sh32], axis=-1)
    h = jnp.maximum(y * scale1 + shift1, 0.0)                          # relu(bn1(conv1))

    # ---- conv2 (in=32, out=64, k=2, L: 2 -> 1): both taps in one matmul ----
    y2 = jnp.dot(h, w2, preferred_element_type=jnp.float32) + b2       # (B, 64)

    # ---- bn2 (batch stats over batch, L=1), fused single-pass stats ----
    ns2 = jnp.sum(y2, axis=0, keepdims=True)
    qs2 = jnp.sum(y2 * y2, axis=0, keepdims=True)
    inv_n2 = 1.0 / B
    m2 = ns2 * inv_n2
    v2 = qs2 * inv_n2 - m2 * m2
    sc2 = lax.rsqrt(v2 + 1e-5) * g2
    sh2 = be2 - m2 * sc2
    h2 = jnp.maximum(y2 * sc2 + sh2, 0.0)                              # (B, 64)

    # ---- fc(64 -> 1), lane-dense output: (1,64) x (B,64)^T -> (1, B) on the MXU ----
    z = lax.dot_general(fcw, h2, (((1,), (1,)), ((), ())),
                        preferred_element_type=jnp.float32) + fcb      # (1, B)

    # ---- std = sqrt(exp(logsigmoid(z)) + 1e-6) = sqrt(sigmoid(z) + 1e-6), exact ----
    sig = 1.0 / (1.0 + jnp.exp(-z))
    out_ref[...] = jnp.sqrt(sig + 1e-6)


# ----------------------------------------------------------------------------
# One-time parameter packing into a single (88, 64) slab (hoisted out of the
# per-call path; run once).
# ----------------------------------------------------------------------------
def prep_params(params):
    f32 = jnp.float32
    C, NF = 4, 32

    # --- conv1 weight (32, 4, 2) folded with im2col into W1' (12, 64) ---
    # row c*3+tau, lanes t*32+f = conv1_w[f, c, tau - t]  (zero where tau - t not in {0,1})
    cw = params["conv1_w"].astype(f32)          # (f, c, s)
    z32 = jnp.zeros((1, NF), f32)
    blocks = []
    for c in range(C):
        w0 = cw[:, c, 0][None, :]               # (1, 32)
        ws1 = cw[:, c, 1][None, :]
        blocks.append(jnp.concatenate([
            jnp.concatenate([w0, z32], axis=1),   # tau = 0
            jnp.concatenate([ws1, w0], axis=1),   # tau = 1
            jnp.concatenate([z32, ws1], axis=1),  # tau = 2
        ], axis=0))
    w1 = jnp.concatenate(blocks, axis=0)        # (12, 64)

    # --- conv2 weight (64, 32, 2) -> stacked (64, 64): rows 0:32 tap 0, rows 32:64 tap 1 ---
    w2 = jnp.concatenate(
        [params["conv2_w"][:, :, 0].T, params["conv2_w"][:, :, 1].T], axis=0
    ).astype(f32)                               # (64, 64)

    # --- per-channel vectors packed as 8 rows of 64 lanes ---
    def row64(v):
        v = jnp.asarray(v, f32).reshape(-1)
        return jnp.zeros((64,), f32).at[: v.shape[0]].set(v)

    vec_rows = jnp.stack([
        jnp.concatenate([params["conv1_b"], params["conv1_b"]]).astype(f32),  # 80
        row64(params["gamma1"]),                                              # 81
        row64(params["beta1"]),                                               # 82
        row64(params["conv2_b"]),                                             # 83
        row64(params["gamma2"]),                                              # 84
        row64(params["beta2"]),                                               # 85
        row64(params["fc_w"][0]),                                             # 86
        row64(params["fc_b"]),                                                # 87
    ], axis=0)                                                                # (8, 64)

    slab = jnp.concatenate([
        w1,                                   # rows  0:12
        jnp.zeros((4, 64), f32),              # rows 12:16  (pad -> w2 tile-aligned)
        w2,                                   # rows 16:80
        vec_rows,                             # rows 80:88
    ], axis=0)                                # (88, 64)
    return slab


# ----------------------------------------------------------------------------
# Wrapper: contiguous (free) reshape of x, then one gridless pallas_call over
# full-array VMEM blocks (problem is tiny, no grid tiling needed).
# Note for future batch scaling (v7x): a gridless call uses one TensorCore; BN's
# full-batch coupling would need a partial-stats + finalize scheme before adding
# a parallel batch grid axis.
# ----------------------------------------------------------------------------
def standard_deviation_model(x, slab):
    B, C, T = x.shape
    assert C == 4 and T == 3, "module is defined for input_channels=4, time_steps=3"

    x_flat = x.reshape(B, C * T).astype(jnp.float32)   # contiguous reshape: no HBM copy

    out_row = pl.pallas_call(
        sdm_kernel,
        out_shape=jax.ShapeDtypeStruct((1, B), jnp.float32),
        in_specs=[pl.BlockSpec(memory_space=pltpu.MemorySpace.VMEM),
                  pl.BlockSpec(memory_space=pltpu.MemorySpace.VMEM)],
        out_specs=pl.BlockSpec(memory_space=pltpu.MemorySpace.VMEM),
    )(x_flat, slab)

    return out_row.reshape(B, 1)


# ----------------------------------------------------------------------------
# Pure-JAX reference (uses lax.conv_general_dilated) for correctness checking.
# ----------------------------------------------------------------------------
def ref_forward(x, p):
    dn = ("NCH", "OIH", "NCH")
    y = lax.conv_general_dilated(x, p["conv1_w"], (1,), "VALID",
                                 dimension_numbers=dn) + p["conv1_b"][None, :, None]
    m = y.mean(axis=(0, 2), keepdims=True)
    v = ((y - m) ** 2).mean(axis=(0, 2), keepdims=True)
    y = jnp.maximum((y - m) / jnp.sqrt(v + 1e-5) * p["gamma1"][None, :, None]
                    + p["beta1"][None, :, None], 0.0)

    y = lax.conv_general_dilated(y, p["conv2_w"], (1,), "VALID",
                                 dimension_numbers=dn) + p["conv2_b"][None, :, None]
    m = y.mean(axis=(0, 2), keepdims=True)
    v = ((y - m) ** 2).mean(axis=(0, 2), keepdims=True)
    y = jnp.maximum((y - m) / jnp.sqrt(v + 1e-5) * p["gamma2"][None, :, None]
                    + p["beta2"][None, :, None], 0.0)

    y = y.reshape(y.shape[0], -1)
    z = y @ p["fc_w"].T + p["fc_b"]
    log_var = jax.nn.log_sigmoid(z)
    return jnp.sqrt(jnp.exp(log_var) + 1e-6)


def init_params(key):
    ks = jax.random.split(key, 8)
    return {
        "conv1_w": jax.random.normal(ks[0], (32, 4, 2), jnp.float32) * 0.2,
        "conv1_b": jax.random.normal(ks[1], (32,), jnp.float32) * 0.1,
        "conv2_w": jax.random.normal(ks[2], (64, 32, 2), jnp.float32) * 0.1,
        "conv2_b": jax.random.normal(ks[3], (64,), jnp.float32) * 0.1,
        "gamma1": 1.0 + 0.1 * jax.random.normal(ks[4], (32,), jnp.float32),
        "beta1": 0.1 * jax.random.normal(ks[5], (32,), jnp.float32),
        "gamma2": 1.0 + 0.1 * jax.random.normal(ks[6], (64,), jnp.float32),
        "beta2": 0.1 * jax.random.normal(ks[7], (64,), jnp.float32),
        "fc_w": jax.random.normal(jax.random.fold_in(key, 100), (1, 64), jnp.float32) * 0.1,
        "fc_b": jax.random.normal(jax.random.fold_in(key, 101), (1,), jnp.float32) * 0.1,
    }


if __name__ == "__main__":
    key = jax.random.PRNGKey(0)
    params = init_params(key)

    # weight packing done ONCE, outside the per-forward path
    slab = jax.block_until_ready(prep_params(params))

    B, C, T = 8, 4, 3  # batch, input_channels, time_steps
    x = jax.random.normal(jax.random.fold_in(key, 999), (B, C, T), jnp.float32)

    fwd = jax.jit(standard_deviation_model)
    out = jax.block_until_ready(fwd(x, slab))

    ref = jax.block_until_ready(ref_forward(x, params))
    assert out.shape == (B, 1)
    np.testing.assert_allclose(np.asarray(out), np.asarray(ref), rtol=1e-3, atol=1e-3)

    print("KERNEL_OK")
</pallas_src>

<mosaic_0001>
module attributes {stable_mosaic.version = 11 : i64} {
  func.func @sdm_kernel(%arg0: memref<8x12xf32, #tpu.memory_space<vmem>>, %arg1: memref<88x64xf32, #tpu.memory_space<vmem>>, %arg2: memref<1x8xf32, #tpu.memory_space<vmem>>) attributes {dimension_semantics = [], scalar_prefetch = 0 : i64, scratch_operands = 0 : i64, tpu.core_type = #tpu.core_type<tc>} {
    %c0 = arith.constant 0 : index
    %c0_0 = arith.constant 0 : index
    %0 = vector.load %arg0[%c0, %c0_0] : memref<8x12xf32, #tpu.memory_space<vmem>>, vector<8x12xf32>
    %c0_1 = arith.constant 0 : index
    %c0_2 = arith.constant 0 : index
    %1 = vector.load %arg1[%c0_1, %c0_2] : memref<88x64xf32, #tpu.memory_space<vmem>>, vector<12x64xf32>
    %c16 = arith.constant 16 : index
    %c0_3 = arith.constant 0 : index
    %2 = vector.load %arg1[%c16, %c0_3] : memref<88x64xf32, #tpu.memory_space<vmem>>, vector<64x64xf32>
    %c80 = arith.constant 80 : index
    %c0_4 = arith.constant 0 : index
    %3 = vector.load %arg1[%c80, %c0_4] : memref<88x64xf32, #tpu.memory_space<vmem>>, vector<1x64xf32>
    %c81 = arith.constant 81 : index
    %c0_5 = arith.constant 0 : index
    %4 = vector.load %arg1[%c81, %c0_5] : memref<88x64xf32, #tpu.memory_space<vmem>>, vector<1x32xf32>
    %c82 = arith.constant 82 : index
    %c0_6 = arith.constant 0 : index
    %5 = vector.load %arg1[%c82, %c0_6] : memref<88x64xf32, #tpu.memory_space<vmem>>, vector<1x32xf32>
    %c83 = arith.constant 83 : index
    %c0_7 = arith.constant 0 : index
    %6 = vector.load %arg1[%c83, %c0_7] : memref<88x64xf32, #tpu.memory_space<vmem>>, vector<1x64xf32>
    %c84 = arith.constant 84 : index
    %c0_8 = arith.constant 0 : index
    %7 = vector.load %arg1[%c84, %c0_8] : memref<88x64xf32, #tpu.memory_space<vmem>>, vector<1x64xf32>
    %c85 = arith.constant 85 : index
    %c0_9 = arith.constant 0 : index
    %8 = vector.load %arg1[%c85, %c0_9] : memref<88x64xf32, #tpu.memory_space<vmem>>, vector<1x64xf32>
    %c86 = arith.constant 86 : index
    %c0_10 = arith.constant 0 : index
    %9 = vector.load %arg1[%c86, %c0_10] : memref<88x64xf32, #tpu.memory_space<vmem>>, vector<1x64xf32>
    %c87 = arith.constant 87 : index
    %c0_11 = arith.constant 0 : index
    %10 = vector.load %arg1[%c87, %c0_11] : memref<88x64xf32, #tpu.memory_space<vmem>>, vector<1x1xf32>
    %cst = arith.constant dense<0.000000e+00> : vector<8x64xf32>
    %11 = tpu.matmul %0, %1, %cst {dimension_numbers = #tpu.dot_dimension_numbers<[1], [0], [0], [1], [0, 0, 1, 1], [], []>} : vector<8x12xf32>, vector<12x64xf32>, vector<8x64xf32> -> vector<8x64xf32>
    %12 = vector.broadcast %3 : vector<1x64xf32> to vector<8x64xf32>
    %13 = arith.addf %11, %12 : vector<8x64xf32>
    %cst_12 = arith.constant dense<0.000000e+00> : vector<64xf32>
    %14 = vector.multi_reduction <add>, %13, %cst_12 [0] : vector<8x64xf32> to vector<64xf32>
    %15 = vector.shape_cast %14 : vector<64xf32> to vector<1x64xf32>
    %16 = arith.mulf %13, %13 : vector<8x64xf32>
    %cst_13 = arith.constant dense<0.000000e+00> : vector<64xf32>
    %17 = vector.multi_reduction <add>, %16, %cst_13 [0] : vector<8x64xf32> to vector<64xf32>
    %18 = vector.shape_cast %17 : vector<64xf32> to vector<1x64xf32>
    %19 = vector.extract_strided_slice %15 {offsets = [0, 0], sizes = [1, 32], strides = [1, 1]} : vector<1x64xf32> to vector<1x32xf32>
    %20 = vector.extract_strided_slice %15 {offsets = [0, 32], sizes = [1, 32], strides = [1, 1]} : vector<1x64xf32> to vector<1x32xf32>
    %21 = arith.addf %19, %20 : vector<1x32xf32>
    %cst_14 = arith.constant 6.250000e-02 : f32
    %22 = vector.broadcast %cst_14 : f32 to vector<1x32xf32>
    %23 = arith.mulf %21, %22 : vector<1x32xf32>
    %24 = vector.extract_strided_slice %18 {offsets = [0, 0], sizes = [1, 32], strides = [1, 1]} : vector<1x64xf32> to vector<1x32xf32>
    %25 = vector.extract_strided_slice %18 {offsets = [0, 32], sizes = [1, 32], strides = [1, 1]} : vector<1x64xf32> to vector<1x32xf32>
    %26 = arith.addf %24, %25 : vector<1x32xf32>
    %cst_15 = arith.constant 6.250000e-02 : f32
    %27 = vector.broadcast %cst_15 : f32 to vector<1x32xf32>
    %28 = arith.mulf %26, %27 : vector<1x32xf32>
    %29 = arith.mulf %23, %23 : vector<1x32xf32>
    %30 = arith.subf %28, %29 : vector<1x32xf32>
    %cst_16 = arith.constant 9.99999974E-6 : f32
    %31 = vector.broadcast %cst_16 : f32 to vector<1x32xf32>
    %32 = arith.addf %30, %31 : vector<1x32xf32>
    %33 = math.rsqrt %32 : vector<1x32xf32>
    %34 = arith.mulf %33, %4 : vector<1x32xf32>
    %35 = arith.mulf %23, %34 : vector<1x32xf32>
    %36 = arith.subf %5, %35 : vector<1x32xf32>
    %37 = tpu.concatenate %34, %34 in 1 : vector<1x32xf32>, vector<1x32xf32> -> vector<1x64xf32>
    %38 = tpu.concatenate %36, %36 in 1 : vector<1x32xf32>, vector<1x32xf32> -> vector<1x64xf32>
    %39 = vector.broadcast %37 : vector<1x64xf32> to vector<8x64xf32>
    %40 = arith.mulf %13, %39 : vector<8x64xf32>
    %41 = vector.broadcast %38 : vector<1x64xf32> to vector<8x64xf32>
    %42 = arith.addf %40, %41 : vector<8x64xf32>
    %cst_17 = arith.constant 0.000000e+00 : f32
    %43 = vector.broadcast %cst_17 : f32 to vector<8x64xf32>
    %44 = arith.maximumf %42, %43 : vector<8x64xf32>
    %cst_18 = arith.constant dense<0.000000e+00> : vector<8x64xf32>
    %45 = tpu.matmul %44, %2, %cst_18 {dimension_numbers = #tpu.dot_dimension_numbers<[1], [0], [0], [1], [0, 0, 1, 1], [], []>} : vector<8x64xf32>, vector<64x64xf32>, vector<8x64xf32> -> vector<8x64xf32>
    %46 = vector.broadcast %6 : vector<1x64xf32> to vector<8x64xf32>
    %47 = arith.addf %45, %46 : vector<8x64xf32>
    %cst_19 = arith.constant dense<0.000000e+00> : vector<64xf32>
    %48 = vector.multi_reduction <add>, %47, %cst_19 [0] : vector<8x64xf32> to vector<64xf32>
    %49 = vector.shape_cast %48 : vector<64xf32> to vector<1x64xf32>
    %50 = arith.mulf %47, %47 : vector<8x64xf32>
    %cst_20 = arith.constant dense<0.000000e+00> : vector<64xf32>
    %51 = vector.multi_reduction <add>, %50, %cst_20 [0] : vector<8x64xf32> to vector<64xf32>
    %52 = vector.shape_cast %51 : vector<64xf32> to vector<1x64xf32>
    %cst_21 = arith.constant 1.250000e-01 : f32
    %53 = vector.broadcast %cst_21 : f32 to vector<1x64xf32>
    %54 = arith.mulf %49, %53 : vector<1x64xf32>
    %cst_22 = arith.constant 1.250000e-01 : f32
    %55 = vector.broadcast %cst_22 : f32 to vector<1x64xf32>
    %56 = arith.mulf %52, %55 : vector<1x64xf32>
    %57 = arith.mulf %54, %54 : vector<1x64xf32>
    %58 = arith.subf %56, %57 : vector<1x64xf32>
    %cst_23 = arith.constant 9.99999974E-6 : f32
    %59 = vector.broadcast %cst_23 : f32 to vector<1x64xf32>
    %60 = arith.addf %58, %59 : vector<1x64xf32>
    %61 = math.rsqrt %60 : vector<1x64xf32>
    %62 = arith.mulf %61, %7 : vector<1x64xf32>
    %63 = arith.mulf %54, %62 : vector<1x64xf32>
    %64 = arith.subf %8, %63 : vector<1x64xf32>
    %65 = vector.broadcast %62 : vector<1x64xf32> to vector<8x64xf32>
    %66 = arith.mulf %47, %65 : vector<8x64xf32>
    %67 = vector.broadcast %64 : vector<1x64xf32> to vector<8x64xf32>
    %68 = arith.addf %66, %67 : vector<8x64xf32>
    %cst_24 = arith.constant 0.000000e+00 : f32
    %69 = vector.broadcast %cst_24 : f32 to vector<8x64xf32>
    %70 = arith.maximumf %68, %69 : vector<8x64xf32>
    %cst_25 = arith.constant dense<0.000000e+00> : vector<1x8xf32>
    %71 = tpu.matmul %9, %70, %cst_25 {dimension_numbers = #tpu.dot_dimension_numbers<[1], [1], [0], [0], [0, 0, 1, 0], [], []>} : vector<1x64xf32>, vector<8x64xf32>, vector<1x8xf32> -> vector<1x8xf32>
    %72 = vector.broadcast %10 : vector<1x1xf32> to vector<1x8xf32>
    %73 = arith.addf %71, %72 : vector<1x8xf32>
    %cst_26 = arith.constant 0.000000e+00 : f32
    %74 = vector.broadcast %cst_26 : f32 to vector<1x8xf32>
    %75 = arith.subf %74, %73 : vector<1x8xf32>
    %76 = math.exp %75 : vector<1x8xf32>
    %cst_27 = arith.constant 1.000000e+00 : f32
    %77 = vector.broadcast %cst_27 : f32 to vector<1x8xf32>
    %78 = arith.addf %77, %76 : vector<1x8xf32>
    %cst_28 = arith.constant 1.000000e+00 : f32
    %79 = vector.broadcast %cst_28 : f32 to vector<1x8xf32>
    %80 = arith.divf %79, %78 : vector<1x8xf32>
    %cst_29 = arith.constant 9.99999997E-7 : f32
    %81 = vector.broadcast %cst_29 : f32 to vector<1x8xf32>
    %82 = arith.addf %80, %81 : vector<1x8xf32>
    %83 = math.sqrt %82 : vector<1x8xf32>
    %c0_30 = arith.constant 0 : index
    %c0_31 = arith.constant 0 : index
    %84 = vector.load %arg2[%c0_30, %c0_31] : memref<1x8xf32, #tpu.memory_space<vmem>>, vector<1x8xf32>
    tpu.vector_store %arg2[%c0_30, %c0_31], %83 {strides = array<i32>} : memref<1x8xf32, #tpu.memory_space<vmem>>, vector<1x8xf32>,
    return
  }
}

</mosaic_0001>

<llo_original>
// kernel: standard_deviation_model.1
$region0: #{standard_deviation_model.1}
  #allocation0 [shape = 'u32[]', space=smem, size = 0x4, offset = 0x4, fixed_abs, tag = 'smem constant byte address 0x4 - core index']
  #allocation1 [shape = 'u32[144,128]{1,0:T(1,128)}', space=vmem, size = 0x12000, scoped, tag = 'internal scratch']
  %s0 = inlined_call_operand.vmem [shape: f32[8,12], index: 0, kind: input, shape index: {}]
  %s1 = inlined_call_operand.vmem [shape: f32[88,64], index: 1, kind: input, shape index: {}]
  %s2 = inlined_call_operand.hbm [shape: f32[1,8], index: 2, kind: output, shape index: {}]
  %s3 = sld [smem:[#allocation0]]
  $region18: #{standard_deviation_model.1} parent=0
    _
  %s5 = ssub.s32 1, %s3
  %s6 = scalar_select 0, %s5, %s3
  $region1: #{standard_deviation_model.1} parent=0
    #allocation2 [shape = 'u8[512]{0}', space=vmem, size = 0x400, scoped, tag = 'output window, operand 0, single buffered']
    #allocation3 [shape = 's32[1]{0}', space=sflag, size = 0x4, scoped, tag = 'scoped memory for standard_deviation_model.1']
    %7 = vsyncpa [#allocation3], 0
    // Predicated region
    $region2: #{standard_deviation_model.1} parent=1 // pred_check
      _
    $region3: #{standard_deviation_model.1} parent=1 // pred_check_branch
      %9 = sbr.rel (0) target = $region5
    $region4: #{standard_deviation_model.1} parent=1 // pred_region
      _
    $region5: #{standard_deviation_model.1} parent=1 // pred_fallthru
      _
    // Predicated region
    $region6: #{standard_deviation_model.1} parent=1 // pred_check
      _
    $region7: #{standard_deviation_model.1} parent=1 // pred_check_branch
      %11 = sbr.rel (0) target = $region9
    $region8: #{standard_deviation_model.1} parent=1 // pred_region
      _
    $region9: #{standard_deviation_model.1} parent=1 // pred_fallthru
      _
    %v12 = vld [vmem:[%s0] sm:$0xff]
    %v13 = vld [vmem:[%s1] sm:$0xff]
    %v14 = vld [vmem:[%s1 + $0x8] sm:$0xf]
    %v15 = vld [vmem:[%s1 + $0x10] sm:$0xff]
    %v16 = vld [vmem:[%s1 + $0x18] sm:$0xff]
    %v17 = vld [vmem:[%s1 + $0x20] sm:$0xff]
    %v18 = vld [vmem:[%s1 + $0x28] sm:$0xff]
    %v19 = vld [vmem:[%s1 + $0x30] sm:$0xff]
    %v20 = vld [vmem:[%s1 + $0x38] sm:$0xff]
    %v21 = vld [vmem:[%s1 + $0x40] sm:$0xff]
    %v22 = vld [vmem:[%s1 + $0x48] sm:$0xff]
    %v23 = vld [vmem:[%s1 + $0x50] sm:$0x1]
    %v24 = vld [vmem:[%s1 + $0x51] sm:$0x1]
    %v25 = vld [vmem:[%s1 + $0x52] sm:$0x1]
    %v26 = vld [vmem:[%s1 + $0x53] sm:$0x1]
    %v27 = vld [vmem:[%s1 + $0x54] sm:$0x1]
    %v28 = vld [vmem:[%s1 + $0x55] sm:$0x1]
    %v29 = vld [vmem:[%s1 + $0x56] sm:$0x1]
    %v30 = vld [vmem:[%s1 + $0x57] sm:$0x1]
    %v31 = vlaneseq
    %v32 = vshrl.u32 %v31, 7
    %v33 = vsub.s32 0, %v32
    %v34 = vrot.slane %v23, %v33
    %vm35 = vcmask 97280
    %v37 = vsel %vm35, %v12, 0
    %vm39 = vcmask 1043456
    %v41 = vsel %vm39, %v14, 0
    %43 = vmatprep.subr.mxu0 0.0
    %44 = vmatpush1.msra.mxu0 0.0
    %45 = vmatprep.subr.mxu0 0.0
    %46 = vmatpush1.msra.mxu0 0.0
    %47 = vmatprep.subr.mxu0 0.0
    %48 = vmatpush1.msra.mxu0 0.0
    %49 = vmatprep.subr.mxu0 0.0
    %50 = vmatpush1.msra.mxu0 0.0
    %51 = vmatprep.subr.mxu0 0.0
    %52 = vmatpush1.msra.mxu0 0.0
    %53 = vmatprep.subr.mxu0 0.0
    %54 = vmatpush1.msra.mxu0 0.0
    %55 = vmatprep.subr.mxu0 0.0
    %56 = vmatpush1.msra.mxu0 0.0
    %57 = vmatprep.subr.mxu0 0.0
    %58 = vmatpush1.msra.mxu0 0.0
    %59 = vmatprep.subr.mxu0 0.0
    %60 = vmatpush1.msra.mxu0 0.0
    %61 = vmatprep.subr.mxu0 0.0
    %62 = vmatpush1.msra.mxu0 0.0
    %63 = vmatprep.subr.mxu0 0.0
    %64 = vmatpush1.msra.mxu0 0.0
    %65 = vmatprep.subr.mxu0 0.0
    %66 = vmatpush1.msra.mxu0 0.0
    %67 = vmatprep.subr.mxu0 0.0
    %68 = vmatpush1.msra.mxu0 0.0
    %69 = vmatprep.subr.mxu0 0.0
    %70 = vmatpush1.msra.mxu0 0.0
    %71 = vmatprep.subr.mxu0 0.0
    %72 = vmatpush1.msra.mxu0 %v41
    %73 = vmatprep.subr.mxu0 0.0
    %74 = vmatpush1.msra.mxu0 %v13
    %75 = vmatprep.subr.mxu0 0.0
    %76 = vmatpush2.msra.mxu0 0.0
    %77 = vmatprep.subr.mxu0 0.0
    %78 = vmatpush2.msra.mxu0 0.0
    %79 = vmatprep.subr.mxu0 0.0
    %80 = vmatpush2.msra.mxu0 0.0
    %81 = vmatprep.subr.mxu0 0.0
    %82 = vmatpush2.msra.mxu0 0.0
    %83 = vmatprep.subr.mxu0 0.0
    %84 = vmatpush2.msra.mxu0 0.0
    %85 = vmatprep.subr.mxu0 0.0
    %86 = vmatpush2.msra.mxu0 0.0
    %87 = vmatprep.subr.mxu0 0.0
    %88 = vmatpush2.msra.mxu0 0.0
    %89 = vmatprep.subr.mxu0 0.0
    %90 = vmatpush2.msra.mxu0 0.0
    %91 = vmatprep.subr.mxu0 0.0
    %92 = vmatpush2.msra.mxu0 0.0
    %93 = vmatprep.subr.mxu0 0.0
    %94 = vmatpush2.msra.mxu0 0.0
    %95 = vmatprep.subr.mxu0 0.0
    %96 = vmatpush2.msra.mxu0 0.0
    %97 = vmatprep.subr.mxu0 0.0
    %98 = vmatpush2.msra.mxu0 0.0
    %99 = vmatprep.subr.mxu0 0.0
    %100 = vmatpush2.msra.mxu0 0.0
    %101 = vmatprep.subr.mxu0 0.0
    %102 = vmatpush2.msra.mxu0 0.0
    %103 = vmatprep.subr.mxu0 0.0
    %104 = vmatpush2.msra.mxu0 0.0
    %105 = vmatprep.subr.mxu0 0.0
    %106 = vmatpush2.msra.mxu0 0.0
    %107 = vmatprep.mubr.f32.mxu0 0.0
    %108 = vmatmul.mubr.f32.gmra.mxu0 %v37
    %v109 = vpop.f32.mrf.mxu0
    %v110 = vadd.f32 %v34, %v109
    %v111 = vpop.f32.mrf.mxu0
    %112 = vdwg.mxu0
    %vm113 = vcmask 523264
    %v114 = vsel %vm113, %v110, 0.0
    %v115 = vrot.slane %v114, 4
    %v116 = vadd.f32 %v114, %v115
    %v117 = vrot.slane %v116, 2
    %v118 = vadd.f32 %v116, %v117
    %v119 = vrot.slane %v118, 1
    %v120 = vadd.f32 %v118, %v119
    %v121 = vmul.f32 %v110, %v110
    %v122 = vsel %vm113, %v121, 0.0
    %v123 = vrot.slane %v122, 4
    %v124 = vadd.f32 %v122, %v123
    %v125 = vrot.slane %v124, 2
    %v126 = vadd.f32 %v124, %v125
    %v127 = vrot.slane %v126, 1
    %v128 = vadd.f32 %v126, %v127
    %130 = vrot.lane.b32.xlu0 %v120, 96
    %v131 = vpop.permute.xlu0 %130
    %v133 = vadd.f32 %v120, %v131
    %v134 = vmul.f32 %v133, 0.0625
    %136 = vrot.lane.b32.xlu0 %v128, 96
    %v137 = vpop.permute.xlu0 %136
    %v139 = vadd.f32 %v128, %v137
    %v140 = vmul.f32 %v139, 0.0625
    %v141 = vmul.f32 %v134, %v134
    %v142 = vsub.f32 %v140, %v141
    %v143 = vadd.f32 %v142, 1e-05
    %v144 = vrsqrt.pop %v143
    %v145 = vmul.f32 %v144, %v24
    %v146 = vmul.f32 %v134, %v145
    %v147 = vsub.f32 %v25, %v146
    %149 = vrot.lane.b32.xlu0 %v145, 32
    %v150 = vpop.permute.xlu0 %149
    %vm152 = vcmask 261120
    %v153 = vsel %vm152, %v145, %v150
    %155 = vrot.lane.b32.xlu0 %v147, 32
    %v156 = vpop.permute.xlu0 %155
    %v158 = vsel %vm152, %v147, %v156
    %v159 = vlaneseq
    %v160 = vshrl.u32 %v159, 7
    %v161 = vsub.s32 0, %v160
    %v162 = vrot.slane %v153, %v161
    %v163 = vmul.f32 %v110, %v162
    %v164 = vlaneseq
    %v165 = vshrl.u32 %v164, 7
    %v166 = vsub.s32 0, %v165
    %v167 = vrot.slane %v158, %v166
    %v168 = vadd.f32 %v163, %v167
    %v169 = vmax.f32 %v168, 0.0
    %v170 = vlaneseq
    %v171 = vshrl.u32 %v170, 7
    %v172 = vsub.s32 0, %v171
    %v173 = vrot.slane %v26, %v172
    %v175 = vsel %vm113, %v169, 0
    %177 = vmatprep.subr.mxu0 0.0
    %178 = vmatpush1.msra.mxu0 0.0
    %179 = vmatprep.subr.mxu0 0.0
    %180 = vmatpush1.msra.mxu0 0.0
    %181 = vmatprep.subr.mxu0 0.0
    %182 = vmatpush1.msra.mxu0 0.0
    %183 = vmatprep.subr.mxu0 0.0
    %184 = vmatpush1.msra.mxu0 0.0
    %185 = vmatprep.subr.mxu0 0.0
    %186 = vmatpush1.msra.mxu0 0.0
    %187 = vmatprep.subr.mxu0 0.0
    %188 = vmatpush1.msra.mxu0 0.0
    %189 = vmatprep.subr.mxu0 0.0
    %190 = vmatpush1.msra.mxu0 0.0
    %191 = vmatprep.subr.mxu0 0.0
    %192 = vmatpush1.msra.mxu0 0.0
    %193 = vmatprep.subr.mxu0 0.0
    %194 = vmatpush1.msra.mxu0 %v22
    %195 = vmatprep.subr.mxu0 0.0
    %196 = vmatpush1.msra.mxu0 %v21
    %197 = vmatprep.subr.mxu0 0.0
    %198 = vmatpush1.msra.mxu0 %v20
    %199 = vmatprep.subr.mxu0 0.0
    %200 = vmatpush1.msra.mxu0 %v19
    %201 = vmatprep.subr.mxu0 0.0
    %202 = vmatpush1.msra.mxu0 %v18
    %203 = vmatprep.subr.mxu0 0.0
    %204 = vmatpush1.msra.mxu0 %v17
    %205 = vmatprep.subr.mxu0 0.0
    %206 = vmatpush1.msra.mxu0 %v16
    %207 = vmatprep.subr.mxu0 0.0
    %208 = vmatpush1.msra.mxu0 %v15
    %209 = vmatprep.subr.mxu0 0.0
    %210 = vmatpush2.msra.mxu0 0.0
    %211 = vmatprep.subr.mxu0 0.0
    %212 = vmatpush2.msra.mxu0 0.0
    %213 = vmatprep.subr.mxu0 0.0
    %214 = vmatpush2.msra.mxu0 0.0
    %215 = vmatprep.subr.mxu0 0.0
    %216 = vmatpush2.msra.mxu0 0.0
    %217 = vmatprep.subr.mxu0 0.0
    %218 = vmatpush2.msra.mxu0 0.0
    %219 = vmatprep.subr.mxu0 0.0
    %220 = vmatpush2.msra.mxu0 0.0
    %221 = vmatprep.subr.mxu0 0.0
    %222 = vmatpush2.msra.mxu0 0.0
    %223 = vmatprep.subr.mxu0 0.0
    %224 = vmatpush2.msra.mxu0 0.0
    %225 = vmatprep.subr.mxu0 0.0
    %226 = vmatpush2.msra.mxu0 0.0
    %227 = vmatprep.subr.mxu0 0.0
    %228 = vmatpush2.msra.mxu0 0.0
    %229 = vmatprep.subr.mxu0 0.0
    %230 = vmatpush2.msra.mxu0 0.0
    %231 = vmatprep.subr.mxu0 0.0
    %232 = vmatpush2.msra.mxu0 0.0
    %233 = vmatprep.subr.mxu0 0.0
    %234 = vmatpush2.msra.mxu0 0.0
    %235 = vmatprep.subr.mxu0 0.0
    %236 = vmatpush2.msra.mxu0 0.0
    %237 = vmatprep.subr.mxu0 0.0
    %238 = vmatpush2.msra.mxu0 0.0
    %239 = vmatprep.subr.mxu0 0.0
    %240 = vmatpush2.msra.mxu0 0.0
    %241 = vmatprep.mubr.f32.mxu0 0.0
    %242 = vmatmul.mubr.f32.gmra.mxu0 %v175
    %v243 = vpop.f32.mrf.mxu0
    %v244 = vadd.f32 %v173, %v243
    %v245 = vpop.f32.mrf.mxu0
    %246 = vdwg.mxu0
    %v247 = vsel %vm113, %v244, 0.0
    %v248 = vrot.slane %v247, 4
    %v249 = vadd.f32 %v247, %v248
    %v250 = vrot.slane %v249, 2
    %v251 = vadd.f32 %v249, %v250
    %v252 = vrot.slane %v251, 1
    %v253 = vadd.f32 %v251, %v252
    %v254 = vmul.f32 %v244, %v244
    %v255 = vsel %vm113, %v254, 0.0
    %v256 = vrot.slane %v255, 4
    %v257 = vadd.f32 %v255, %v256
    %v258 = vrot.slane %v257, 2
    %v259 = vadd.f32 %v257, %v258
    %v260 = vrot.slane %v259, 1
    %v261 = vadd.f32 %v259, %v260
    %v262 = vmul.f32 %v253, 0.125
    %v263 = vmul.f32 %v261, 0.125
    %v264 = vmul.f32 %v262, %v262
    %v265 = vsub.f32 %v263, %v264
    %v266 = vadd.f32 %v265, 1e-05
    %v267 = vrsqrt.pop %v266
    %v268 = vmul.f32 %v267, %v27
    %v269 = vmul.f32 %v262, %v268
    %v270 = vsub.f32 %v28, %v269
    %v271 = vlaneseq
    %v272 = vshrl.u32 %v271, 7
    %v273 = vsub.s32 0, %v272
    %v274 = vrot.slane %v268, %v273
    %v275 = vmul.f32 %v244, %v274
    %v276 = vlaneseq
    %v277 = vshrl.u32 %v276, 7
    %v278 = vsub.s32 0, %v277
    %v279 = vrot.slane %v270, %v278
    %v280 = vadd.f32 %v275, %v279
    %v281 = vmax.f32 %v280, 0.0
    %283 = vset.pattern.permute.xlu0 0
    %284 = vperm.xlu0 %283, %v30
    %v285 = vpop.permute.xlu0 %284
    %v288 = vsel %vm113, %v29, 0
    %v291 = vsel %vm113, %v281, 0
    %293 = vmatprep.subr.mxu0 0.0
    %294 = vmatpush1.xpose.msra.mxu0 0.0
    %295 = vmatprep.subr.mxu0 0.0
    %296 = vmatpush1.xpose.msra.mxu0 0.0
    %297 = vmatprep.subr.mxu0 0.0
    %298 = vmatpush1.xpose.msra.mxu0 0.0
    %299 = vmatprep.subr.mxu0 0.0
    %300 = vmatpush1.xpose.msra.mxu0 0.0
    %301 = vmatprep.subr.mxu0 0.0
    %302 = vmatpush1.xpose.msra.mxu0 0.0
    %303 = vmatprep.subr.mxu0 0.0
    %304 = vmatpush1.xpose.msra.mxu0 0.0
    %305 = vmatprep.subr.mxu0 0.0
    %306 = vmatpush1.xpose.msra.mxu0 0.0
    %307 = vmatprep.subr.mxu0 0.0
    %308 = vmatpush1.xpose.msra.mxu0 0.0
    %309 = vmatprep.subr.mxu0 0.0
    %310 = vmatpush1.xpose.msra.mxu0 0.0
    %311 = vmatprep.subr.mxu0 0.0
    %312 = vmatpush1.xpose.msra.mxu0 0.0
    %313 = vmatprep.subr.mxu0 0.0
    %314 = vmatpush1.xpose.msra.mxu0 0.0
    %315 = vmatprep.subr.mxu0 0.0
    %316 = vmatpush1.xpose.msra.mxu0 0.0
    %317 = vmatprep.subr.mxu0 0.0
    %318 = vmatpush1.xpose.msra.mxu0 0.0
    %319 = vmatprep.subr.mxu0 0.0
    %320 = vmatpush1.xpose.msra.mxu0 0.0
    %321 = vmatprep.subr.mxu0 0.0
    %322 = vmatpush1.xpose.msra.mxu0 0.0
    %323 = vmatprep.subr.mxu0 0.0
    %324 = vmatpush1.xpose.msra.mxu0 %v291
    %325 = vmatprep.subr.mxu0 0.0
    %326 = vmatpush2.xpose.msra.mxu0 0.0
    %327 = vmatprep.subr.mxu0 0.0
    %328 = vmatpush2.xpose.msra.mxu0 0.0
    %329 = vmatprep.subr.mxu0 0.0
    %330 = vmatpush2.xpose.msra.mxu0 0.0
    %331 = vmatprep.subr.mxu0 0.0
    %332 = vmatpush2.xpose.msra.mxu0 0.0
    %333 = vmatprep.subr.mxu0 0.0
    %334 = vmatpush2.xpose.msra.mxu0 0.0
    %335 = vmatprep.subr.mxu0 0.0
    %336 = vmatpush2.xpose.msra.mxu0 0.0
    %337 = vmatprep.subr.mxu0 0.0
    %338 = vmatpush2.xpose.msra.mxu0 0.0
    %339 = vmatprep.subr.mxu0 0.0
    %340 = vmatpush2.xpose.msra.mxu0 0.0
    %341 = vmatprep.subr.mxu0 0.0
    %342 = vmatpush2.xpose.msra.mxu0 0.0
    %343 = vmatprep.subr.mxu0 0.0
    %344 = vmatpush2.xpose.msra.mxu0 0.0
    %345 = vmatprep.subr.mxu0 0.0
    %346 = vmatpush2.xpose.msra.mxu0 0.0
    %347 = vmatprep.subr.mxu0 0.0
    %348 = vmatpush2.xpose.msra.mxu0 0.0
    %349 = vmatprep.subr.mxu0 0.0
    %350 = vmatpush2.xpose.msra.mxu0 0.0
    %351 = vmatprep.subr.mxu0 0.0
    %352 = vmatpush2.xpose.msra.mxu0 0.0
    %353 = vmatprep.subr.mxu0 0.0
    %354 = vmatpush2.xpose.msra.mxu0 0.0
    %355 = vmatprep.subr.mxu0 0.0
    %356 = vmatpush2.xpose.msra.mxu0 0.0
    %357 = vmatprep.mubr.f32.mxu0 0.0
    %358 = vmatmul.mubr.f32.gmra.mxu0 %v288
    %v359 = vpop.f32.mrf.mxu0
    %v360 = vadd.f32 %v285, %v359
    %v361 = vpop.f32.mrf.mxu0
    %362 = vdwg.mxu0
    %v363 = vsub.f32 0.0, %v360
    %v364 = vmul.f32 %v363, 1.442695
    %v365 = vpow.pop %v364
    %v366 = vadd.f32 %v365, 1.0
    %v367 = vrcp.pop %v366
    %v368 = vmul.f32 1.0, %v367
    %v369 = vadd.f32 %v368, 1e-06
    %v370 = vrsqrt.pop %v369
    %v371 = vmul.f32 %v369, %v370
    %vm372 = vcmp.eq.f32.partialorder %v369, inf
    %v373 = vsel %vm372, %v369, %v371
    %vm374 = vcmp.eq.f32.partialorder %v369, 0.0
    %v375 = vand.u32 %v369, 2147483648
    %v376 = vsel %vm374, %v375, %v373
    %vm377 = vcmask 57344
    %378 = vst.msk [vmem:[#allocation2] sm:$0x1] %vm377, %v376
    // Predicated region
    $region10: #{standard_deviation_model.1} parent=1 // pred_check
      _
    $region11: #{standard_deviation_model.1} parent=1 // pred_check_branch
      %380 = sbr.rel (0) target = $region13
    $region12: #{standard_deviation_model.1} parent=1 // pred_region
      %s382 = ssub.s32 16, 16
      %383 = vsyncadd [#allocation3], %s382
      %s385 = sshll.u32 [#allocation2], 4
      %s386 = int_to_ptr.vmem [resolvable:$true] %s385
      %388 = dma.vmem_to_hbm [thread:$0]  %s386, 16, %s2, [#allocation3]
    $region13: #{standard_deviation_model.1} parent=1 // pred_fallthru
      _
    // Predicated region
    $region14: #{standard_deviation_model.1} parent=1 // pred_check
      _
    $region15: #{standard_deviation_model.1} parent=1 // pred_check_branch
      %390 = sbr.rel (0) target = $region17
    $region16: #{standard_deviation_model.1} parent=1 // pred_region
      %391 = dma.done [#allocation3], 16
    $region17: #{standard_deviation_model.1} parent=1 // pred_fallthru
      _
    %392 = vsyncpa [#allocation3], 1

</llo_original>
